<compile_context>
chip_gen: v7x
topology: tpu7x:2x2x1
jax: 0.10.0
libtpu: 0.0.40
codegen_flags: <defaults>
</compile_context>

<pallas_src>
import jax
import jax.numpy as jnp
from jax.experimental import pallas as pl
from jax.experimental.pallas import tpu as pltpu


def _round_up(x, m):
    return ((x + m - 1) // m) * m


def _normalize_text_kernel(txt_ref, out_ref):
    # L2-normalize text rows once; emit in the MXU operand dtype.
    txt = txt_ref[...].astype(jnp.float32)                       # (M, D)
    inv = jax.lax.rsqrt(jnp.sum(txt * txt, axis=-1, keepdims=True))
    out_ref[...] = (txt * inv).astype(out_ref.dtype)


def _clip_score_kernel(txtn_ref, img_ref, out_ref):
    # txtn_ref: (M, D) pre-normalized text (resident block, constant index_map)
    # img_ref : (TILE_N, D) image tile (streamed over the grid, native dtype)
    # out_ref : (1, TILE_N) lane-dense scores for this tile
    img = img_ref[...]                                           # (TILE_N, D)
    txt = txtn_ref[...]                                          # (M, D)
    tile = img.shape[0]

    # logits[j, i] = <txt_j_hat, img_i>  (image still un-normalized).
    # Contract both minor dims directly on the MXU (flash-attention q.k^T
    # pattern, no explicit transpose of the big tile), accumulate in f32.
    logits = jax.lax.dot_general(
        txt, img.astype(txt.dtype),
        dimension_numbers=(((1,), (1,)), ((), ())),
        preferred_element_type=jnp.float32,
    )                                                            # (M, TILE_N)

    # Fold the 100.0 softmax temperature and the per-image inverse norm into a
    # single (1, TILE_N) broadcast on the f32 logits (rsqrt on the EUP), instead
    # of scaling + re-casting the whole (TILE_N, D) tile.
    imgf = img.astype(jnp.float32)
    sumsq = jnp.sum(imgf * imgf, axis=-1, keepdims=True)         # (TILE_N, 1)
    scale = jnp.reshape(100.0 * jax.lax.rsqrt(sumsq), (1, tile)) # (1, TILE_N)
    logits = logits * scale

    # Column-wise (per image) numerically-stable softmax -- keep the max
    # subtraction: logits reach +/-100 and exp(100) overflows f32.  Only the
    # last text row's probability is needed.
    m = jnp.max(logits, axis=0, keepdims=True)                   # (1, TILE_N)
    e = jnp.exp(logits - m)                                      # (M, TILE_N)
    # NOTE: for very large M on v6e/v7x this exp could be done in bf16 with an
    # f32 column-sum (not on v5e: no bf16 EUP/VPU).  M is small here; keep f32.
    denom = jnp.sum(e, axis=0, keepdims=True)                    # (1, TILE_N)
    # denom >= 1 (contains exp(0) from the max row) -> approx reciprocal is
    # safe and rides the otherwise-idle EUP slot.
    out_ref[...] = e[-1:, :] * pl.reciprocal(denom, approx=True)


def clip_score(image_features, text_features, *, tile_n=1024, mxu_dtype=None):
    """image_features: (N, D), text_features: (M, D). Returns (N,) float32.

    The image stream is DMA'd in the dtype it is given: pass bf16 features from
    a bf16 model to halve HBM traffic on this bandwidth-bound kernel (don't add
    a convert pass just for this).  mxu_dtype (default: the image dtype) is the
    dtype fed to the MXU; softmax / normalization math is always f32, so with
    f32 inputs the result matches the PyTorch reference to float rounding.
    """
    n, d = image_features.shape
    m, d2 = text_features.shape
    assert d == d2, "feature dims must match"
    if mxu_dtype is None:
        mxu_dtype = image_features.dtype

    # ---- 1) Hoisted text normalization (runs once, not once per image tile).
    txt_n = pl.pallas_call(
        _normalize_text_kernel,
        out_shape=jax.ShapeDtypeStruct((m, d), mxu_dtype),
    )(text_features)

    # ---- 2) Tile selection.  Large lane-aligned tiles amortize the per-step
    # overhead; cap so one streamed buffer stays <= ~6 MiB, keeping
    # 2x image buffers + 2x resident text + (M, TILE_N) f32 logits well inside
    # the 32 MiB scoped VMEM budget even on v7x (64 MiB physical).
    itemsize = jnp.dtype(image_features.dtype).itemsize
    tile_n = max(128, _round_up(tile_n, 128))
    cap = max(128, ((6 * 1024 * 1024) // max(1, d * itemsize)) // 128 * 128)
    tile_n = min(tile_n, cap)

    if n <= 256:
        # Tiny problem: single full-dim block (no ragged edge, no padding).
        tile = n
    else:
        # >= 2 grid steps whenever possible so the "parallel" axis feeds both
        # TensorCores on v7x; ragged last tile handled by partial blocks.
        tile = min(tile_n, _round_up(pl.cdiv(n, 2), 128))
    grid = (pl.cdiv(n, tile),)

    out = pl.pallas_call(
        _clip_score_kernel,
        out_shape=jax.ShapeDtypeStruct((1, n), jnp.float32),
        grid_spec=pltpu.PrefetchScalarGridSpec(
            num_scalar_prefetch=0,
            grid=grid,
            in_specs=[
                # Normalized text: constant index_map -> resident in VMEM
                # across all grid steps (no re-DMA, no re-normalization).
                # (Its default 2x buffering is accounted for in the budget.)
                pl.BlockSpec((m, d), lambda i: (0, 0)),
                # Image tile: streamed + double-buffered over N, native dtype.
                pl.BlockSpec((tile, d), lambda i: (i, 0)),
            ],
            # Lane-dense output: each step writes a (1, TILE_N) slab.
            out_specs=pl.BlockSpec((1, tile), lambda i: (0, i)),
        ),
        compiler_params=pltpu.CompilerParams(
            # Image tiles are independent -> shard across TensorCores on v7x.
            dimension_semantics=("parallel",),
            vmem_limit_bytes=32 * 1024 * 1024,
        ),
    )(txt_n, image_features)

    # TODO(synk): optional v7x fp8(e4m3) image stream + MXU fp8 path (halves
    # DMA bytes again vs bf16) -- needs accuracy validation under the x100
    # temperature, so not enabled by default.
    return out[0]


def _reference(image_features, text_features):
    txt = text_features / jnp.linalg.norm(text_features, axis=-1, keepdims=True)
    img = image_features / jnp.linalg.norm(image_features, axis=-1, keepdims=True)
    sim = jax.nn.softmax(100.0 * img @ txt.T, axis=-1)
    return sim[:, -1]


if __name__ == "__main__":
    key = jax.random.PRNGKey(0)
    k_img, k_txt, k_img2, k_txt2 = jax.random.split(key, 4)

    # Small shapes consistent with the forward: N images x D features,
    # M text/class embeddings x D features.
    N, M, D = 8, 8, 32
    image_features = jax.random.normal(k_img, (N, D), dtype=jnp.float32)
    text_features = jax.random.normal(k_txt, (M, D), dtype=jnp.float32)

    ref = _reference(image_features, text_features)

    # f32 inputs -> f32 MXU by default: tight check against the pure-JAX ref.
    scores = clip_score(image_features, text_features)
    jax.block_until_ready(scores)
    assert scores.shape == (N,)
    assert jnp.allclose(scores, ref, atol=3e-3, rtol=3e-3), (scores, ref)

    # Ragged multi-tile path: N not a tile multiple, grid has 2 steps, last
    # tile partially out-of-bounds (exercises the no-jnp.pad path).
    N2, M2, D2 = 300, 16, 64
    img2 = jax.random.normal(k_img2, (N2, D2), dtype=jnp.float32)
    txt2 = jax.random.normal(k_txt2, (M2, D2), dtype=jnp.float32)
    ref2 = _reference(img2, txt2)
    scores2 = clip_score(img2, txt2)
    jax.block_until_ready(scores2)
    assert scores2.shape == (N2,)
    assert jnp.allclose(scores2, ref2, atol=3e-3, rtol=3e-3), (scores2, ref2)

    # bf16 streaming path (caller already holds bf16 features): half the image
    # DMA bytes; softmax math stays f32.  bf16 operand rounding under the x100
    # temperature can shift near-balanced probabilities by a few percent, so
    # only sanity-bound it.
    img_bf16 = image_features.astype(jnp.bfloat16)
    txt_bf16 = text_features.astype(jnp.bfloat16)
    ref_bf16 = _reference(img_bf16.astype(jnp.float32),
                          txt_bf16.astype(jnp.float32))
    scores_bf16 = clip_score(img_bf16, txt_bf16)
    jax.block_until_ready(scores_bf16)
    assert scores_bf16.shape == (N,)
    assert bool(jnp.all(jnp.isfinite(scores_bf16)))
    assert jnp.allclose(scores_bf16, ref_bf16, atol=0.25), (scores_bf16, ref_bf16)

    print("KERNEL_OK")
</pallas_src>

<mosaic_0001>
module attributes {stable_mosaic.version = 11 : i64} {
  func.func @_normalize_text_kernel(%arg0: memref<8x32xf32, #tpu.memory_space<vmem>>, %arg1: memref<8x32xf32, #tpu.memory_space<vmem>>) attributes {dimension_semantics = [], scalar_prefetch = 0 : i64, scratch_operands = 0 : i64, tpu.core_type = #tpu.core_type<tc>} {
    %c0 = arith.constant 0 : index
    %c0_0 = arith.constant 0 : index
    %0 = vector.load %arg0[%c0, %c0_0] : memref<8x32xf32, #tpu.memory_space<vmem>>, vector<8x32xf32>
    %1 = arith.mulf %0, %0 : vector<8x32xf32>
    %cst = arith.constant dense<0.000000e+00> : vector<8xf32>
    %2 = vector.multi_reduction <add>, %1, %cst [1] : vector<8x32xf32> to vector<8xf32>
    %3 = vector.shape_cast %2 : vector<8xf32> to vector<8x1xf32>
    %4 = math.rsqrt %3 : vector<8x1xf32>
    %5 = vector.broadcast %4 : vector<8x1xf32> to vector<8x32xf32>
    %6 = arith.mulf %0, %5 : vector<8x32xf32>
    %c0_1 = arith.constant 0 : index
    %c0_2 = arith.constant 0 : index
    %7 = vector.load %arg1[%c0_1, %c0_2] : memref<8x32xf32, #tpu.memory_space<vmem>>, vector<8x32xf32>
    tpu.vector_store %arg1[%c0_1, %c0_2], %6 {strides = array<i32>} : memref<8x32xf32, #tpu.memory_space<vmem>>, vector<8x32xf32>,
    return
  }
}

</mosaic_0001>

<llo_original>
// kernel: tpu_custom_call.1
$region0: #{tpu_custom_call.1}
  #allocation0 [shape = 'u32[]', space=smem, size = 0x4, offset = 0x4, fixed_abs, tag = 'smem constant byte address 0x4 - core index']
  #allocation1 [shape = 'u32[144,128]{1,0:T(1,128)}', space=vmem, size = 0x12000, scoped, tag = 'internal scratch']
  %s0 = inlined_call_operand.hbm [shape: f32[8,32], index: 0, kind: input, shape index: {}]
  %s1 = inlined_call_operand.hbm [shape: f32[8,32], index: 1, kind: output, shape index: {}]
  %s2 = sld [smem:[#allocation0]]
  $region18: #{tpu_custom_call.1} parent=0
    _
  %s4 = ssub.s32 1, %s2
  %s5 = scalar_select 0, %s4, %s2
  $region1: #{tpu_custom_call.1} parent=0
    #allocation2 [shape = 'u8[4096]{0}', space=vmem, size = 0x1000, scoped, tag = 'input window, operand 0, single buffered']
    #allocation3 [shape = 's32[1]{0}', space=sflag, size = 0x4, scoped, tag = 'scoped memory for tpu_custom_call.1']
    #allocation4 [shape = 's32[1]{0}', space=sflag, size = 0x4, scoped, tag = 'scoped memory for tpu_custom_call.1']
    #allocation5 [shape = 'u8[4096]{0}', space=vmem, size = 0x1000, scoped, tag = 'output window, operand 0, single buffered']
    %6 = vsyncpa [#allocation3], 0
    %7 = vsyncpa [#allocation4], 0
    // Predicated region
    $region2: #{tpu_custom_call.1} parent=1 // pred_check
      _
    $region3: #{tpu_custom_call.1} parent=1 // pred_check_branch
      %9 = sbr.rel (0) target = $region5
    $region4: #{tpu_custom_call.1} parent=1 // pred_region
      %s11 = ssub.s32 128, 128
      %12 = vsyncadd [#allocation3], %s11
      %s14 = sshll.u32 [#allocation2], 4
      %s15 = int_to_ptr.vmem [resolvable:$true] %s14
      %17 = dma.hbm_to_vmem [thread:$0]  %s0, 128, %s15, [#allocation3]
    $region5: #{tpu_custom_call.1} parent=1 // pred_fallthru
      _
    // Predicated region
    $region6: #{tpu_custom_call.1} parent=1 // pred_check
      _
    $region7: #{tpu_custom_call.1} parent=1 // pred_check_branch
      %19 = sbr.rel (0) target = $region9
    $region8: #{tpu_custom_call.1} parent=1 // pred_region
      %20 = dma.done [#allocation3], 128
    $region9: #{tpu_custom_call.1} parent=1 // pred_fallthru
      _
    %v21 = vld [vmem:[#allocation2] sm:$0xff]
    %v22 = vmul.f32 %v21, %v21
    %vm23 = vcmask 261120
    %v24 = vsel %vm23, %v22, 0.0
    %25 = vadd.xlane.f32.xlu0 %v24
    %v26 = vpop.xlane.xlu0 %25
    %v27 = vrsqrt.pop %v26
    %v28 = vmul.f32 %v21, %v27
    %29 = vst.msk [vmem:[#allocation5] sm:$0xff] %vm23, %v28
    // Predicated region
    $region10: #{tpu_custom_call.1} parent=1 // pred_check
      _
    $region11: #{tpu_custom_call.1} parent=1 // pred_check_branch
      %31 = sbr.rel (0) target = $region13
    $region12: #{tpu_custom_call.1} parent=1 // pred_region
      %s33 = ssub.s32 128, 128
      %34 = vsyncadd [#allocation4], %s33
      %s36 = sshll.u32 [#allocation5], 4
      %s37 = int_to_ptr.vmem [resolvable:$true] %s36
      %39 = dma.vmem_to_hbm [thread:$0]  %s37, 128, %s1, [#allocation4]
    $region13: #{tpu_custom_call.1} parent=1 // pred_fallthru
      _
    // Predicated region
    $region14: #{tpu_custom_call.1} parent=1 // pred_check
      _
    $region15: #{tpu_custom_call.1} parent=1 // pred_check_branch
      %41 = sbr.rel (0) target = $region17
    $region16: #{tpu_custom_call.1} parent=1 // pred_region
      %42 = dma.done [#allocation4], 128
    $region17: #{tpu_custom_call.1} parent=1 // pred_fallthru
      _
    %43 = vsyncpa [#allocation3], 1
    %44 = vsyncpa [#allocation4], 1

</llo_original>
